<compile_context>
chip_gen: v7x
topology: tpu7x:2x2x1
jax: 0.10.0
libtpu: 0.0.40
codegen_flags: <defaults>
</compile_context>

<pallas_src>
import jax
import jax.numpy as jnp
from jax.experimental import pallas as pl
from jax.experimental.pallas import tpu as pltpu


def mlp_kernel(x_ref, w1_ref, b1_ref, w2_ref, b2_ref, w3_ref, b3_ref, o_ref):
    # x_ref: (tb, 784) f32 (streamed)      w1: (784, 128) bf16   b1: (1, 128) f32
    # w2:    (128, 64) bf16  b2: (1, 64) f32
    # w3:    (64, 10)  bf16  b3: (1, 10) f32
    # o_ref: (tb, 10) f32 log-probabilities
    x = x_ref[...].astype(jnp.bfloat16)  # in-kernel cast: VPU op, hidden under the HBM bound

    h1 = jnp.dot(x, w1_ref[...], preferred_element_type=jnp.float32) + b1_ref[...]
    h1 = jnp.maximum(h1, 0.0)  # ReLU

    h2 = jnp.dot(h1.astype(jnp.bfloat16), w2_ref[...],
                 preferred_element_type=jnp.float32) + b2_ref[...]
    h2 = jnp.maximum(h2, 0.0)  # ReLU

    logits = jnp.dot(h2.astype(jnp.bfloat16), w3_ref[...],
                     preferred_element_type=jnp.float32) + b3_ref[...]

    # LogSoftmax over dim=1 (numerically stable, f32, per-row -> padded rows stay isolated)
    m = jnp.max(logits, axis=-1, keepdims=True)
    z = logits - m
    lse = jnp.log(jnp.sum(jnp.exp(z), axis=-1, keepdims=True))
    o_ref[...] = (z - lse).astype(o_ref.dtype)


def _round_up(n, m):
    return ((n + m - 1) // m) * m


def mnist_model_forward(x, params, tile_b=2048):
    """x: (B, 1, 28, 28) or anything flattenable to (-1, 784). Returns (B, 10) f32 log-probs."""
    w1, b1, w2, b2, w3, b3 = params

    x2d = x.reshape(-1, 784).astype(jnp.float32)
    B = x2d.shape[0]

    # Pad only to the f32 sublane granule (8 rows) -- no whole-array repack to a tile multiple.
    Bp = _round_up(B, 8)
    if Bp != B:
        x2d = jnp.pad(x2d, ((0, Bp - B), (0, 0)))

    # Tile selection: biggest tile (<= tile_b rows) to amortize per-step overhead, but keep
    # >= 2 grid steps when the batch is big enough so v7x can shard across its 2 TCs.
    tb = min(tile_b, Bp)
    if Bp == tb and Bp >= 32:
        tb = _round_up(pl.cdiv(Bp, 2), 8)
    grid = (pl.cdiv(Bp, tb),)

    # Weights resident in VMEM as bf16 (~0.2 MiB); biases added to the f32 accumulators.
    w1b, w2b, w3b = (w.astype(jnp.bfloat16) for w in (w1, w2, w3))
    b1f, b2f, b3f = (b.astype(jnp.float32) for b in (b1, b2, b3))

    weight_bytes = 2 * (784 * 128 + 128 * 64 + 64 * 10)
    cost = pl.CostEstimate(
        flops=2 * Bp * (784 * 128 + 128 * 64 + 64 * 10),
        transcendentals=Bp * 11,                       # exp(10) + log per row
        bytes_accessed=Bp * 784 * 4 + Bp * 10 * 4 + weight_bytes,
    )

    out = pl.pallas_call(
        mlp_kernel,
        out_shape=jax.ShapeDtypeStruct((Bp, 10), jnp.float32),
        grid_spec=pltpu.PrefetchScalarGridSpec(
            num_scalar_prefetch=0,
            grid=grid,
            in_specs=[
                pl.BlockSpec((tb, 784), lambda i: (i, 0)),    # streamed f32 input tiles
                pl.BlockSpec((784, 128), lambda i: (0, 0)),   # grid-resident weights / biases
                pl.BlockSpec((1, 128), lambda i: (0, 0)),
                pl.BlockSpec((128, 64), lambda i: (0, 0)),
                pl.BlockSpec((1, 64), lambda i: (0, 0)),
                pl.BlockSpec((64, 10), lambda i: (0, 0)),
                pl.BlockSpec((1, 10), lambda i: (0, 0)),
            ],
            out_specs=pl.BlockSpec((tb, 10), lambda i: (i, 0)),
        ),
        compiler_params=pltpu.CompilerParams(
            dimension_semantics=("parallel",),         # v7x: shard batch across 2 TCs
            vmem_limit_bytes=32 * 1024 * 1024,         # large f32 tile also fits v5e's scoped VMEM
        ),
        cost_estimate=cost,
    )(x2d, w1b, b1f, w2b, b2f, w3b, b3f)

    return out[:B]


def init_params(key):
    """Deterministic init mimicking PyTorch nn.Linear default (U[-1/sqrt(fan_in), +])."""
    def linear(key, fan_in, fan_out):
        kw, kb = jax.random.split(key)
        bound = 1.0 / jnp.sqrt(fan_in)
        # stored as (in, out) == transpose of PyTorch's (out, in) weight
        w = jax.random.uniform(kw, (fan_in, fan_out), jnp.float32, -bound, bound)
        b = jax.random.uniform(kb, (1, fan_out), jnp.float32, -bound, bound)
        return w, b

    k1, k2, k3 = jax.random.split(key, 3)
    w1, b1 = linear(k1, 784, 128)
    w2, b2 = linear(k2, 128, 64)
    w3, b3 = linear(k3, 64, 10)
    return (w1, b1, w2, b2, w3, b3)


def _reference_forward(x, params):
    """Pure-JAX reference with the same bf16 matmul inputs / f32 accumulation."""
    w1, b1, w2, b2, w3, b3 = params
    x2d = x.reshape(-1, 784).astype(jnp.bfloat16)
    w1b, w2b, w3b = (w.astype(jnp.bfloat16) for w in (w1, w2, w3))

    h1 = jnp.maximum(jnp.dot(x2d, w1b, preferred_element_type=jnp.float32) + b1, 0.0)
    h2 = jnp.maximum(jnp.dot(h1.astype(jnp.bfloat16), w2b,
                             preferred_element_type=jnp.float32) + b2, 0.0)
    logits = jnp.dot(h2.astype(jnp.bfloat16), w3b,
                     preferred_element_type=jnp.float32) + b3
    return jax.nn.log_softmax(logits, axis=-1)


def _check(x, params):
    out = mnist_model_forward(x, params)
    jax.block_until_ready(out)
    B = x.reshape(-1, 784).shape[0]
    assert out.shape == (B, 10)
    # log-probabilities exponentiate-and-sum to ~1 per row
    probs_sum = jnp.sum(jnp.exp(out), axis=-1)
    assert bool(jnp.all(jnp.abs(probs_sum - 1.0) < 1e-3))
    # matches a pure-JAX reference with the same mixed precision
    ref = _reference_forward(x, params)
    assert bool(jnp.max(jnp.abs(out - ref)) < 5e-2)
    return out


if __name__ == "__main__":
    key = jax.random.PRNGKey(0)
    kx, kx2, kp = jax.random.split(key, 3)
    params = init_params(kp)

    # Small MNIST-like batch: (B, C, H, W) = (8, 1, 28, 28) -> single grid step.
    x_small = jax.random.normal(kx, (8, 1, 28, 28), jnp.float32)
    _check(x_small, params)

    # Non-multiple-of-8 batch: exercises the 8-row pad, the 2-step grid split and
    # the partial final block (rows are independent; padded rows are sliced off).
    x_odd = jax.random.normal(kx2, (37, 1, 28, 28), jnp.float32)
    _check(x_odd, params)

    print("KERNEL_OK")
</pallas_src>

<mosaic_0001>
module attributes {stable_mosaic.version = 11 : i64} {
  func.func @mlp_kernel(%arg0: i32, %arg1: memref<8x784xf32, #tpu.memory_space<vmem>>, %arg2: memref<784x128xbf16, #tpu.memory_space<vmem>>, %arg3: memref<1x128xf32, #tpu.memory_space<vmem>>, %arg4: memref<128x64xbf16, #tpu.memory_space<vmem>>, %arg5: memref<1x64xf32, #tpu.memory_space<vmem>>, %arg6: memref<64x10xbf16, #tpu.memory_space<vmem>>, %arg7: memref<1x10xf32, #tpu.memory_space<vmem>>, %arg8: memref<8x10xf32, #tpu.memory_space<vmem>>) attributes {dimension_semantics = [#tpu.dimension_semantics<parallel>], iteration_bounds = array<i64: 1>, scalar_prefetch = 0 : i64, scratch_operands = 0 : i64, tpu.core_type = #tpu.core_type<tc>, window_params = [{transform_indices = @transform_0, window_bounds = array<i64: 8, 784>}, {pipeline_mode = #tpu.pipeline_mode<synchronous>, transform_indices = @transform_1, window_bounds = array<i64: 784, 128>}, {pipeline_mode = #tpu.pipeline_mode<synchronous>, transform_indices = @transform_2, window_bounds = array<i64: 1, 128>}, {pipeline_mode = #tpu.pipeline_mode<synchronous>, transform_indices = @transform_3, window_bounds = array<i64: 128, 64>}, {pipeline_mode = #tpu.pipeline_mode<synchronous>, transform_indices = @transform_4, window_bounds = array<i64: 1, 64>}, {pipeline_mode = #tpu.pipeline_mode<synchronous>, transform_indices = @transform_5, window_bounds = array<i64: 64, 10>}, {pipeline_mode = #tpu.pipeline_mode<synchronous>, transform_indices = @transform_6, window_bounds = array<i64: 1, 10>}, {transform_indices = @transform_7, window_bounds = array<i64: 8, 10>}]} {
    %c0 = arith.constant 0 : index
    %c0_0 = arith.constant 0 : index
    %0 = vector.load %arg1[%c0, %c0_0] : memref<8x784xf32, #tpu.memory_space<vmem>>, vector<8x784xf32>
    %1 = arith.truncf %0 : vector<8x784xf32> to vector<8x784xbf16>
    %c0_1 = arith.constant 0 : index
    %c0_2 = arith.constant 0 : index
    %2 = vector.load %arg2[%c0_1, %c0_2] : memref<784x128xbf16, #tpu.memory_space<vmem>>, vector<784x128xbf16>
    %cst = arith.constant dense<0.000000e+00> : vector<8x128xf32>
    %3 = tpu.matmul %1, %2, %cst {dimension_numbers = #tpu.dot_dimension_numbers<[1], [0], [0], [1], [0, 0, 1, 1], [], []>} : vector<8x784xbf16>, vector<784x128xbf16>, vector<8x128xf32> -> vector<8x128xf32>
    %c0_3 = arith.constant 0 : index
    %c0_4 = arith.constant 0 : index
    %4 = vector.load %arg3[%c0_3, %c0_4] : memref<1x128xf32, #tpu.memory_space<vmem>>, vector<1x128xf32>
    %5 = vector.broadcast %4 : vector<1x128xf32> to vector<8x128xf32>
    %6 = arith.addf %3, %5 : vector<8x128xf32>
    %cst_5 = arith.constant 0.000000e+00 : f32
    %7 = vector.broadcast %cst_5 : f32 to vector<8x128xf32>
    %8 = arith.maximumf %6, %7 : vector<8x128xf32>
    %9 = arith.truncf %8 : vector<8x128xf32> to vector<8x128xbf16>
    %c0_6 = arith.constant 0 : index
    %c0_7 = arith.constant 0 : index
    %10 = vector.load %arg4[%c0_6, %c0_7] : memref<128x64xbf16, #tpu.memory_space<vmem>>, vector<128x64xbf16>
    %cst_8 = arith.constant dense<0.000000e+00> : vector<8x64xf32>
    %11 = tpu.matmul %9, %10, %cst_8 {dimension_numbers = #tpu.dot_dimension_numbers<[1], [0], [0], [1], [0, 0, 1, 1], [], []>} : vector<8x128xbf16>, vector<128x64xbf16>, vector<8x64xf32> -> vector<8x64xf32>
    %c0_9 = arith.constant 0 : index
    %c0_10 = arith.constant 0 : index
    %12 = vector.load %arg5[%c0_9, %c0_10] : memref<1x64xf32, #tpu.memory_space<vmem>>, vector<1x64xf32>
    %13 = vector.broadcast %12 : vector<1x64xf32> to vector<8x64xf32>
    %14 = arith.addf %11, %13 : vector<8x64xf32>
    %cst_11 = arith.constant 0.000000e+00 : f32
    %15 = vector.broadcast %cst_11 : f32 to vector<8x64xf32>
    %16 = arith.maximumf %14, %15 : vector<8x64xf32>
    %17 = arith.truncf %16 : vector<8x64xf32> to vector<8x64xbf16>
    %c0_12 = arith.constant 0 : index
    %c0_13 = arith.constant 0 : index
    %18 = vector.load %arg6[%c0_12, %c0_13] : memref<64x10xbf16, #tpu.memory_space<vmem>>, vector<64x10xbf16>
    %cst_14 = arith.constant dense<0.000000e+00> : vector<8x10xf32>
    %19 = tpu.matmul %17, %18, %cst_14 {dimension_numbers = #tpu.dot_dimension_numbers<[1], [0], [0], [1], [0, 0, 1, 1], [], []>} : vector<8x64xbf16>, vector<64x10xbf16>, vector<8x10xf32> -> vector<8x10xf32>
    %c0_15 = arith.constant 0 : index
    %c0_16 = arith.constant 0 : index
    %20 = vector.load %arg7[%c0_15, %c0_16] : memref<1x10xf32, #tpu.memory_space<vmem>>, vector<1x10xf32>
    %21 = vector.broadcast %20 : vector<1x10xf32> to vector<8x10xf32>
    %22 = arith.addf %19, %21 : vector<8x10xf32>
    %cst_17 = arith.constant dense<0xFF800000> : vector<8xf32>
    %23 = vector.multi_reduction <maximumf>, %22, %cst_17 [1] : vector<8x10xf32> to vector<8xf32>
    %24 = vector.shape_cast %23 : vector<8xf32> to vector<8x1xf32>
    %25 = vector.broadcast %24 : vector<8x1xf32> to vector<8x10xf32>
    %26 = arith.subf %22, %25 : vector<8x10xf32>
    %27 = math.exp %26 : vector<8x10xf32>
    %cst_18 = arith.constant dense<0.000000e+00> : vector<8xf32>
    %28 = vector.multi_reduction <add>, %27, %cst_18 [1] : vector<8x10xf32> to vector<8xf32>
    %29 = vector.shape_cast %28 : vector<8xf32> to vector<8x1xf32>
    %30 = math.log %29 : vector<8x1xf32>
    %31 = vector.broadcast %30 : vector<8x1xf32> to vector<8x10xf32>
    %32 = arith.subf %26, %31 : vector<8x10xf32>
    %c0_19 = arith.constant 0 : index
    %c0_20 = arith.constant 0 : index
    %33 = vector.load %arg8[%c0_19, %c0_20] : memref<8x10xf32, #tpu.memory_space<vmem>>, vector<8x10xf32>
    tpu.vector_store %arg8[%c0_19, %c0_20], %32 {strides = array<i32>} : memref<8x10xf32, #tpu.memory_space<vmem>>, vector<8x10xf32>,
    return
  }
  func.func @transform_0(%arg0: i32) -> (i32, i32) {
    %c0_i32 = arith.constant 0 : i32
    %c0_i32_0 = arith.constant 0 : i32
    return %arg0, %c0_i32 : i32, i32
  }
  func.func @transform_1(%arg0: i32) -> (i32, i32) {
    %c0_i32 = arith.constant 0 : i32
    %c0_i32_0 = arith.constant 0 : i32
    %c0_i32_1 = arith.constant 0 : i32
    return %c0_i32, %c0_i32_0 : i32, i32
  }
  func.func @transform_2(%arg0: i32) -> (i32, i32) {
    %c0_i32 = arith.constant 0 : i32
    %c0_i32_0 = arith.constant 0 : i32
    %c0_i32_1 = arith.constant 0 : i32
    return %c0_i32, %c0_i32_0 : i32, i32
  }
  func.func @transform_3(%arg0: i32) -> (i32, i32) {
    %c0_i32 = arith.constant 0 : i32
    %c0_i32_0 = arith.constant 0 : i32
    %c0_i32_1 = arith.constant 0 : i32
    return %c0_i32, %c0_i32_0 : i32, i32
  }
  func.func @transform_4(%arg0: i32) -> (i32, i32) {
    %c0_i32 = arith.constant 0 : i32
    %c0_i32_0 = arith.constant 0 : i32
    %c0_i32_1 = arith.constant 0 : i32
    return %c0_i32, %c0_i32_0 : i32, i32
  }
  func.func @transform_5(%arg0: i32) -> (i32, i32) {
    %c0_i32 = arith.constant 0 : i32
    %c0_i32_0 = arith.constant 0 : i32
    %c0_i32_1 = arith.constant 0 : i32
    return %c0_i32, %c0_i32_0 : i32, i32
  }
  func.func @transform_6(%arg0: i32) -> (i32, i32) {
    %c0_i32 = arith.constant 0 : i32
    %c0_i32_0 = arith.constant 0 : i32
    %c0_i32_1 = arith.constant 0 : i32
    return %c0_i32, %c0_i32_0 : i32, i32
  }
  func.func @transform_7(%arg0: i32) -> (i32, i32) {
    %c0_i32 = arith.constant 0 : i32
    %c0_i32_0 = arith.constant 0 : i32
    return %arg0, %c0_i32 : i32, i32
  }
}

</mosaic_0001>

<llo_original>
// kernel: tpu_custom_call.1
$region0: #{tpu_custom_call.1}
  #allocation0 [shape = 'u32[]', space=smem, size = 0x4, offset = 0x4, fixed_abs, tag = 'smem constant byte address 0x4 - core index']
  #allocation1 [shape = 'u32[144,128]{1,0:T(1,128)}', space=vmem, size = 0x12000, scoped, tag = 'internal scratch']
  %s0 = inlined_call_operand.vmem [shape: f32[8,784], index: 0, kind: input, shape index: {}]
  %s1 = inlined_call_operand.hbm [shape: bf16[784,128], index: 1, kind: input, shape index: {}]
  %s2 = inlined_call_operand.vmem [shape: f32[1,128], index: 2, kind: input, shape index: {}]
  %s3 = inlined_call_operand.vmem [shape: bf16[128,64], index: 3, kind: input, shape index: {}]
  %s4 = inlined_call_operand.vmem [shape: f32[1,64], index: 4, kind: input, shape index: {}]
  %s5 = inlined_call_operand.vmem [shape: bf16[64,10], index: 5, kind: input, shape index: {}]
  %s6 = inlined_call_operand.vmem [shape: f32[1,10], index: 6, kind: input, shape index: {}]
  %s7 = inlined_call_operand.hbm [shape: f32[8,10], index: 7, kind: output, shape index: {}]
  %s8 = sld [smem:[#allocation0]]
  $region42: #{tpu_custom_call.1} parent=0
    _
  %s10 = ssub.s32 1, %s8
  %s11 = scalar_select 0, %s10, %s8
  $region1: #{tpu_custom_call.1} parent=0
    #allocation2 [shape = 'u8[200704]{0}', space=vmem, size = 0x31000, scoped, tag = 'input window, operand 1, single buffered']
    #allocation3 [shape = 's32[1]{0}', space=sflag, size = 0x4, scoped, tag = 'scoped memory for tpu_custom_call.1']
    #allocation4 [shape = 's32[1]{0}', space=sflag, size = 0x4, scoped, tag = 'scoped memory for tpu_custom_call.1']
    #allocation5 [shape = 'u8[4096]{0}', space=vmem, size = 0x1000, scoped, tag = 'output window, operand 0, single buffered']
    %12 = vsyncpa [#allocation3], 0
    %13 = vsyncpa [#allocation4], 0
    // Predicated region
    $region2: #{tpu_custom_call.1} parent=1 // pred_check
      _
    $region3: #{tpu_custom_call.1} parent=1 // pred_check_branch
      %15 = sbr.rel (0) target = $region5
    $region4: #{tpu_custom_call.1} parent=1 // pred_region
      _
    $region5: #{tpu_custom_call.1} parent=1 // pred_fallthru
      _
    // Predicated region
    $region6: #{tpu_custom_call.1} parent=1 // pred_check
      _
    $region7: #{tpu_custom_call.1} parent=1 // pred_check_branch
      %17 = sbr.rel (0) target = $region9
    $region8: #{tpu_custom_call.1} parent=1 // pred_region
      %s19 = ssub.s32 6272, 6272
      %20 = vsyncadd [#allocation3], %s19
      %s21 = sshll.u32 [#allocation2], 4
      %s22 = int_to_ptr.vmem [resolvable:$true] %s21
      %27 = dma.hbm_to_vmem [thread:$0]  %s1, 6272, %s22, [#allocation3], 64, 64, 4
    $region9: #{tpu_custom_call.1} parent=1 // pred_fallthru
      _
    // Predicated region
    $region10: #{tpu_custom_call.1} parent=1 // pred_check
      _
    $region11: #{tpu_custom_call.1} parent=1 // pred_check_branch
      %29 = sbr.rel (0) target = $region13
    $region12: #{tpu_custom_call.1} parent=1 // pred_region
      _
    $region13: #{tpu_custom_call.1} parent=1 // pred_fallthru
      _
    // Predicated region
    $region14: #{tpu_custom_call.1} parent=1 // pred_check
      _
    $region15: #{tpu_custom_call.1} parent=1 // pred_check_branch
      %31 = sbr.rel (0) target = $region17
    $region16: #{tpu_custom_call.1} parent=1 // pred_region
      _
    $region17: #{tpu_custom_call.1} parent=1 // pred_fallthru
      _
    // Predicated region
    $region18: #{tpu_custom_call.1} parent=1 // pred_check
      _
    $region19: #{tpu_custom_call.1} parent=1 // pred_check_branch
      %33 = sbr.rel (0) target = $region21
    $region20: #{tpu_custom_call.1} parent=1 // pred_region
      _
    $region21: #{tpu_custom_call.1} parent=1 // pred_fallthru
      _
    // Predicated region
    $region22: #{tpu_custom_call.1} parent=1 // pred_check
      _
    $region23: #{tpu_custom_call.1} parent=1 // pred_check_branch
      %35 = sbr.rel (0) target = $region25
    $region24: #{tpu_custom_call.1} parent=1 // pred_region
      _
    $region25: #{tpu_custom_call.1} parent=1 // pred_fallthru
      _
    // Predicated region
    $region26: #{tpu_custom_call.1} parent=1 // pred_check
      _
    $region27: #{tpu_custom_call.1} parent=1 // pred_check_branch
      %37 = sbr.rel (0) target = $region29
    $region28: #{tpu_custom_call.1} parent=1 // pred_region
      _
    $region29: #{tpu_custom_call.1} parent=1 // pred_fallthru
      _
    // Predicated region
    $region30: #{tpu_custom_call.1} parent=1 // pred_check
      _
    $region31: #{tpu_custom_call.1} parent=1 // pred_check_branch
      %39 = sbr.rel (0) target = $region33
    $region32: #{tpu_custom_call.1} parent=1 // pred_region
      %40 = dma.done [#allocation3], 6272
    $region33: #{tpu_custom_call.1} parent=1 // pred_fallthru
      _
    %v42 = vld [vmem:[%s0] sm:$0xff]
    %v43 = vld [vmem:[%s0 + $0x8] sm:$0xff]
    %v44 = vld [vmem:[%s0 + $0x10] sm:$0xff]
    %v45 = vld [vmem:[%s0 + $0x18] sm:$0xff]
    %v46 = vld [vmem:[%s0 + $0x20] sm:$0xff]
    %v47 = vld [vmem:[%s0 + $0x28] sm:$0xff]
    %v48 = vld [vmem:[%s0 + $0x30] sm:$0xff]
    %v49 = vpack.c.bf16 %v42, %v42
    %v50 = vpack.c.bf16 %v43, %v43
    %v51 = vpack.c.bf16 %v44, %v44
    %v52 = vpack.c.bf16 %v45, %v45
    %v53 = vpack.c.bf16 %v46, %v46
    %v54 = vpack.c.bf16 %v47, %v47
    %v55 = vpack.c.bf16 %v48, %v48
    %v56 = vld [vmem:[#allocation2] sm:$0xf]
    %v57 = vld [vmem:[#allocation2 + $0x4] sm:$0xf]
    %v58 = vld [vmem:[#allocation2 + $0x8] sm:$0xf]
    %v59 = vld [vmem:[#allocation2 + $0xc] sm:$0xf]
    %v60 = vld [vmem:[#allocation2 + $0x10] sm:$0xf]
    %v61 = vld [vmem:[#allocation2 + $0x14] sm:$0xf]
    %v62 = vld [vmem:[#allocation2 + $0x18] sm:$0xf]
    %v63 = vld [vmem:[#allocation2 + $0x1c] sm:$0xf]
    %v64 = vld [vmem:[#allocation2 + $0x20] sm:$0xf]
    %v65 = vld [vmem:[#allocation2 + $0x24] sm:$0xf]
    %v66 = vld [vmem:[#allocation2 + $0x28] sm:$0xf]
    %v67 = vld [vmem:[#allocation2 + $0x2c] sm:$0xf]
    %v68 = vld [vmem:[#allocation2 + $0x30] sm:$0xf]
    %v69 = vld [vmem:[#allocation2 + $0x34] sm:$0xf]
    %v70 = vld [vmem:[#allocation2 + $0x38] sm:$0xf]
    %v71 = vld [vmem:[#allocation2 + $0x3c] sm:$0xf]
    %v72 = vld [vmem:[#allocation2 + $0x40] sm:$0xf]
    %v73 = vld [vmem:[#allocation2 + $0x44] sm:$0xf]
    %v74 = vld [vmem:[#allocation2 + $0x48] sm:$0xf]
    %v75 = vld [vmem:[#allocation2 + $0x4c] sm:$0xf]
    %v76 = vld [vmem:[#allocation2 + $0x50] sm:$0xf]
    %v77 = vld [vmem:[#allocation2 + $0x54] sm:$0xf]
    %v78 = vld [vmem:[#allocation2 + $0x58] sm:$0xf]
    %v79 = vld [vmem:[#allocation2 + $0x5c] sm:$0xf]
    %v80 = vld [vmem:[#allocation2 + $0x60] sm:$0xf]
    %v81 = vld [vmem:[#allocation2 + $0x64] sm:$0xf]
    %v82 = vld [vmem:[#allocation2 + $0x68] sm:$0xf]
    %v83 = vld [vmem:[#allocation2 + $0x6c] sm:$0xf]
    %v84 = vld [vmem:[#allocation2 + $0x70] sm:$0xf]
    %v85 = vld [vmem:[#allocation2 + $0x74] sm:$0xf]
    %v86 = vld [vmem:[#allocation2 + $0x78] sm:$0xf]
    %v87 = vld [vmem:[#allocation2 + $0x7c] sm:$0xf]
    %v88 = vld [vmem:[#allocation2 + $0x80] sm:$0xf]
    %v89 = vld [vmem:[#allocation2 + $0x84] sm:$0xf]
    %v90 = vld [vmem:[#allocation2 + $0x88] sm:$0xf]
    %v91 = vld [vmem:[#allocation2 + $0x8c] sm:$0xf]
    %v92 = vld [vmem:[#allocation2 + $0x90] sm:$0xf]
    %v93 = vld [vmem:[#allocation2 + $0x94] sm:$0xf]
    %v94 = vld [vmem:[#allocation2 + $0x98] sm:$0xf]
    %v95 = vld [vmem:[#allocation2 + $0x9c] sm:$0xf]
    %v96 = vld [vmem:[#allocation2 + $0xa0] sm:$0xf]
    %v97 = vld [vmem:[#allocation2 + $0xa4] sm:$0xf]
    %v98 = vld [vmem:[#allocation2 + $0xa8] sm:$0xf]
    %v99 = vld [vmem:[#allocation2 + $0xac] sm:$0xf]
    %v100 = vld [vmem:[#allocation2 + $0xb0] sm:$0xf]
    %v101 = vld [vmem:[#allocation2 + $0xb4] sm:$0xf]
    %v102 = vld [vmem:[#allocation2 + $0xb8] sm:$0xf]
    %v103 = vld [vmem:[#allocation2 + $0xbc] sm:$0xf]
    %v104 = vld [vmem:[#allocation2 + $0xc0] sm:$0xf]
    %v105 = vld [vmem:[#allocation2 + $0xc4] sm:$0xf]
    %v106 = vld [vmem:[#allocation2 + $0xc8] sm:$0xf]
    %v107 = vld [vmem:[#allocation2 + $0xcc] sm:$0xf]
    %v108 = vld [vmem:[#allocation2 + $0xd0] sm:$0xf]
    %v109 = vld [vmem:[#allocation2 + $0xd4] sm:$0xf]
    %v110 = vld [vmem:[#allocation2 + $0xd8] sm:$0xf]
    %v111 = vld [vmem:[#allocation2 + $0xdc] sm:$0xf]
    %v112 = vld [vmem:[#allocation2 + $0xe0] sm:$0xf]
    %v113 = vld [vmem:[#allocation2 + $0xe4] sm:$0xf]
    %v114 = vld [vmem:[#allocation2 + $0xe8] sm:$0xf]
    %v115 = vld [vmem:[#allocation2 + $0xec] sm:$0xf]
    %v116 = vld [vmem:[#allocation2 + $0xf0] sm:$0xf]
    %v117 = vld [vmem:[#allocation2 + $0xf4] sm:$0xf]
    %v118 = vld [vmem:[#allocation2 + $0xf8] sm:$0xf]
    %v119 = vld [vmem:[#allocation2 + $0xfc] sm:$0xf]
    %v120 = vld [vmem:[#allocation2 + $0x100] sm:$0xf]
    %v121 = vld [vmem:[#allocation2 + $0x104] sm:$0xf]
    %v122 = vld [vmem:[#allocation2 + $0x108] sm:$0xf]
    %v123 = vld [vmem:[#allocation2 + $0x10c] sm:$0xf]
    %v124 = vld [vmem:[#allocation2 + $0x110] sm:$0xf]
    %v125 = vld [vmem:[#allocation2 + $0x114] sm:$0xf]
    %v126 = vld [vmem:[#allocation2 + $0x118] sm:$0xf]
    %v127 = vld [vmem:[#allocation2 + $0x11c] sm:$0xf]
    %v128 = vld [vmem:[#allocation2 + $0x120] sm:$0xf]
    %v129 = vld [vmem:[#allocation2 + $0x124] sm:$0xf]
    %v130 = vld [vmem:[#allocation2 + $0x128] sm:$0xf]
    %v131 = vld [vmem:[#allocation2 + $0x12c] sm:$0xf]
    %v132 = vld [vmem:[#allocation2 + $0x130] sm:$0xf]
    %v133 = vld [vmem:[#allocation2 + $0x134] sm:$0xf]
    %v134 = vld [vmem:[#allocation2 + $0x138] sm:$0xf]
    %v135 = vld [vmem:[#allocation2 + $0x13c] sm:$0xf]
    %v136 = vld [vmem:[#allocation2 + $0x140] sm:$0xf]
    %v137 = vld [vmem:[#allocation2 + $0x144] sm:$0xf]
    %v138 = vld [vmem:[#allocation2 + $0x148] sm:$0xf]
    %v139 = vld [vmem:[#allocation2 + $0x14c] sm:$0xf]
    %v140 = vld [vmem:[#allocation2 + $0x150] sm:$0xf]
    %v141 = vld [vmem:[#allocation2 + $0x154] sm:$0xf]
    %v142 = vld [vmem:[#allocation2 + $0x158] sm:$0xf]
    %v143 = vld [vmem:[#allocation2 + $0x15c] sm:$0xf]
    %v144 = vld [vmem:[#allocation2 + $0x160] sm:$0xf]
    %v145 = vld [vmem:[#allocation2 + $0x164] sm:$0xf]
    %v146 = vld [vmem:[#allocation2 + $0x168] sm:$0xf]
    %v147 = vld [vmem:[#allocation2 + $0x16c] sm:$0xf]
    %v148 = vld [vmem:[#allocation2 + $0x170] sm:$0xf]
    %v149 = vld [vmem:[#allocation2 + $0x174] sm:$0xf]
    %v150 = vld [vmem:[#allocation2 + $0x178] sm:$0xf]
    %v151 = vld [vmem:[#allocation2 + $0x17c] sm:$0xf]
    %v152 = vld [vmem:[#allocation2 + $0x180] sm:$0xf]
    %v153 = vld [vmem:[#allocation2 + $0x184] sm:$0xf]
    %v154 = vld [vmem:[%s2] sm:$0x1]
    %v156 = vlaneseq
    %v157 = vshrl.u32 %v156, 7
    %v158 = vsub.s32 0, %v157
    %v159 = vrot.slane %v154, %v158
    %v259 = vunpack.c.l.b16 %v56
    %v260 = vunpack.c.l.b16 %v57
    %v261 = vunpack.c.l.b16 %v58
    %v262 = vunpack.c.l.b16 %v59
    %v263 = vunpack.c.l.b16 %v60
    %v264 = vunpack.c.l.b16 %v61
    %v265 = vunpack.c.l.b16 %v62
    %v266 = vunpack.c.l.b16 %v63
    %v267 = vunpack.c.l.b16 %v64
    %v268 = vunpack.c.l.b16 %v65
    %v269 = vunpack.c.l.b16 %v66
    %v270 = vunpack.c.l.b16 %v67
    %v271 = vunpack.c.l.b16 %v68
    %v272 = vunpack.c.l.b16 %v69
    %v273 = vunpack.c.l.b16 %v70
    %v274 = vunpack.c.l.b16 %v71
    %v275 = vunpack.c.l.b16 %v72
    %v276 = vunpack.c.l.b16 %v73
    %v277 = vunpack.c.l.b16 %v74
    %v278 = vunpack.c.l.b16 %v75
    %v279 = vunpack.c.l.b16 %v76
    %v280 = vunpack.c.l.b16 %v77
    %v281 = vunpack.c.l.b16 %v78
    %v282 = vunpack.c.l.b16 %v79
    %v283 = vunpack.c.l.b16 %v80
    %v284 = vunpack.c.l.b16 %v81
    %v285 = vunpack.c.l.b16 %v82
    %v286 = vunpack.c.l.b16 %v83
    %v287 = vunpack.c.l.b16 %v84
    %v288 = vunpack.c.l.b16 %v85
    %v289 = vunpack.c.l.b16 %v86
    %v290 = vunpack.c.l.b16 %v87
    %v291 = vunpack.c.l.b16 %v88
    %v292 = vunpack.c.l.b16 %v89
    %v293 = vunpack.c.l.b16 %v90
    %v294 = vunpack.c.l.b16 %v91
    %v295 = vunpack.c.l.b16 %v92
    %v296 = vunpack.c.l.b16 %v93
    %v297 = vunpack.c.l.b16 %v94
    %v298 = vunpack.c.l.b16 %v95
    %v299 = vunpack.c.l.b16 %v96
    %v300 = vunpack.c.l.b16 %v97
    %v301 = vunpack.c.l.b16 %v98
    %v302 = vunpack.c.l.b16 %v99
    %v303 = vunpack.c.l.b16 %v100
    %v304 = vunpack.c.l.b16 %v101
    %v305 = vunpack.c.l.b16 %v102
    %v306 = vunpack.c.l.b16 %v103
    %v307 = vunpack.c.l.b16 %v104
    %v308 = vunpack.c.l.b16 %v105
    %v309 = vunpack.c.l.b16 %v106
    %v310 = vunpack.c.l.b16 %v107
    %v311 = vunpack.c.l.b16 %v108
    %v312 = vunpack.c.l.b16 %v109
    %v313 = vunpack.c.l.b16 %v110
    %v314 = vunpack.c.l.b16 %v111
    %v315 = vunpack.c.l.b16 %v112
    %v316 = vunpack.c.l.b16 %v113
    %v317 = vunpack.c.l.b16 %v114
    %v318 = vunpack.c.l.b16 %v115
    %v319 = vunpack.c.l.b16 %v116
    %v320 = vunpack.c.l.b16 %v117
    %v321 = vunpack.c.l.b16 %v118
    %v322 = vunpack.c.l.b16 %v119
    %v323 = vunpack.c.l.b16 %v120
    %v324 = vunpack.c.l.b16 %v121
    %v325 = vunpack.c.l.b16 %v122
    %v326 = vunpack.c.l.b16 %v123
    %v327 = vunpack.c.l.b16 %v124
    %v328 = vunpack.c.l.b16 %v125
    %v329 = vunpack.c.l.b16 %v126
    %v330 = vunpack.c.l.b16 %v127
    %v331 = vunpack.c.l.b16 %v128
    %v332 = vunpack.c.l.b16 %v129
    %v333 = vunpack.c.l.b16 %v130
    %v334 = vunpack.c.l.b16 %v131
    %v335 = vunpack.c.l.b16 %v132
    %v336 = vunpack.c.l.b16 %v133
    %v337 = vunpack.c.l.b16 %v134
    %v338 = vunpack.c.l.b16 %v135
    %v339 = vunpack.c.l.b16 %v136
    %v340 = vunpack.c.l.b16 %v137
    %v341 = vunpack.c.l.b16 %v138
    %v342 = vunpack.c.l.b16 %v139
    %v343 = vunpack.c.l.b16 %v140
    %v344 = vunpack.c.l.b16 %v141
    %v345 = vunpack.c.l.b16 %v142
    %v346 = vunpack.c.l.b16 %v143
    %v347 = vunpack.c.l.b16 %v144
    %v348 = vunpack.c.l.b16 %v145
    %v349 = vunpack.c.l.b16 %v146
    %v350 = vunpack.c.l.b16 %v147
    %v351 = vunpack.c.l.b16 %v148
    %v352 = vunpack.c.l.b16 %v149
    %v353 = vunpack.c.l.b16 %v150
    %v354 = vunpack.c.l.b16 %v151
    %v355 = vunpack.c.l.b16 %v152
    %v356 = vunpack.c.l.b16 %v153
    %v357 = vpack.c.b16 %v260, %v259
    %v358 = vpack.c.b16 %v262, %v261
    %v359 = vpack.c.b16 %v264, %v263
    %v360 = vpack.c.b16 %v266, %v265
    %v361 = vpack.c.b16 %v268, %v267
    %v362 = vpack.c.b16 %v270, %v269
    %v363 = vpack.c.b16 %v272, %v271
    %v364 = vpack.c.b16 %v274, %v273
    %v365 = vpack.c.b16 %v276, %v275
    %v366 = vpack.c.b16 %v278, %v277
    %v367 = vpack.c.b16 %v280, %v279
    %v368 = vpack.c.b16 %v282, %v281
    %v369 = vpack.c.b16 %v284, %v283
    %v370 = vpack.c.b16 %v286, %v285
    %v371 = vpack.c.b16 %v288, %v287
    %v372 = vpack.c.b16 %v290, %v289
    %v373 = vpack.c.b16 %v292, %v291
    %v374 = vpack.c.b16 %v294, %v293
    %v375 = vpack.c.b16 %v296, %v295
    %v376 = vpack.c.b16 %v298, %v297
    %v377 = vpack.c.b16 %v300, %v299
    %v378 = vpack.c.b16 %v302, %v301
    %v379 = vpack.c.b16 %v304, %v303
    %v380 = vpack.c.b16 %v306, %v305
    %v381 = vpack.c.b16 %v308, %v307
    %v382 = vpack.c.b16 %v310, %v309
    %v383 = vpack.c.b16 %v312, %v311
    %v384 = vpack.c.b16 %v314, %v313
    %v385 = vpack.c.b16 %v316, %v315
    %v386 = vpack.c.b16 %v318, %v317
    %v387 = vpack.c.b16 %v320, %v319
    %v388 = vpack.c.b16 %v322, %v321
    %v389 = vpack.c.b16 %v324, %v323
    %v390 = vpack.c.b16 %v326, %v325
    %v391 = vpack.c.b16 %v328, %v327
    %v392 = vpack.c.b16 %v330, %v329
    %v393 = vpack.c.b16 %v332, %v331
    %v394 = vpack.c.b16 %v334, %v333
    %v395 = vpack.c.b16 %v336, %v335
    %v396 = vpack.c.b16 %v338, %v337
    %v397 = vpack.c.b16 %v340, %v339
    %v398 = vpack.c.b16 %v342, %v341
    %v399 = vpack.c.b16 %v344, %v343
    %v400 = vpack.c.b16 %v346, %v345
    %v401 = vpack.c.b16 %v348, %v347
    %v402 = vpack.c.b16 %v350, %v349
    %v403 = vpack.c.b16 %v352, %v351
    %v404 = vpack.c.b16 %v354, %v353
    %v405 = vpack.c.b16 %v356, %v355
    %vm455 = vcmask 130048
    %v457 = vsel %vm455, %v55, 0
    %459 = vmatprep.subr.bf16.mxu0 0
    %460 = vmatpush1.bf16.msra.mxu0 %v357
    %461 = vmatprep.subr.bf16.mxu0 0
    %462 = vmatpush1.bf16.msra.mxu0 %v358
    %463 = vmatprep.subr.bf16.mxu0 0
    %464 = vmatpush1.bf16.msra.mxu0 %v359
    %465 = vmatprep.subr.bf16.mxu0 0
    %466 = vmatpush1.bf16.msra.mxu0 %v360
    %467 = vmatprep.subr.bf16.mxu0 0
    %468 = vmatpush1.bf16.msra.mxu0 %v361
    %469 = vmatprep.subr.bf16.mxu0 0
    %470 = vmatpush1.bf16.msra.mxu0 %v362
    %471 = vmatprep.subr.bf16.mxu0 0
    %472 = vmatpush1.bf16.msra.mxu0 %v363
    %473 = vmatprep.subr.bf16.mxu0 0
    %474 = vmatpush1.bf16.msra.mxu0 %v364
    %475 = vmatprep.subr.bf16.mxu0 0
    %476 = vmatpush1.bf16.msra.mxu0 %v365
    %477 = vmatprep.subr.bf16.mxu0 0
    %478 = vmatpush1.bf16.msra.mxu0 %v366
    %479 = vmatprep.subr.bf16.mxu0 0
    %480 = vmatpush1.bf16.msra.mxu0 %v367
    %481 = vmatprep.subr.bf16.mxu0 0
    %482 = vmatpush1.bf16.msra.mxu0 %v368
    %483 = vmatprep.subr.bf16.mxu0 0
    %484 = vmatpush1.bf16.msra.mxu0 %v369
    %485 = vmatprep.subr.bf16.mxu0 0
    %486 = vmatpush1.bf16.msra.mxu0 %v370
    %487 = vmatprep.subr.bf16.mxu0 0
    %488 = vmatpush1.bf16.msra.mxu0 %v371
    %489 = vmatprep.subr.bf16.mxu0 0
    %490 = vmatpush1.bf16.msra.mxu0 %v372
    %491 = vmatprep.mubr.bf16.mxu0 %v50
    %492 = vmatmul.mubr.bf16.gmra.mrb[0].mxu0 %v49
    %v493 = vpop.f32.mrb[0].mxu0
    %v494 = vadd.f32 %v159, %v493
    %v495 = vpop.f32.mrb[0].mxu0
    %v496 = vpop.f32.mrb[0].mxu0
    %v497 = vpop.f32.mrb[0].mxu0
    %498 = vdwg.mxu0
    %499 = vmatprep.subr.bf16.mxu0 0
    %500 = vmatpush1.bf16.msra.mxu0 %v373
    %501 = vmatprep.subr.bf16.mxu0 0
    %502 = vmatpush1.bf16.msra.mxu0 %v374
    %503 = vmatprep.subr.bf16.mxu0 0
    %504 = vmatpush1.bf16.msra.mxu0 %v375
    %505 = vmatprep.subr.bf16.mxu0 0
    %506 = vmatpush1.bf16.msra.mxu0 %v376
    %507 = vmatprep.subr.bf16.mxu0 0
    %508 = vmatpush1.bf16.msra.mxu0 %v377
    %509 = vmatprep.subr.bf16.mxu0 0
    %510 = vmatpush1.bf16.msra.mxu0 %v378
    %511 = vmatprep.subr.bf16.mxu0 0
    %512 = vmatpush1.bf16.msra.mxu0 %v379
    %513 = vmatprep.subr.bf16.mxu0 0
    %514 = vmatpush1.bf16.msra.mxu0 %v380
    %515 = vmatprep.subr.bf16.mxu0 0
    %516 = vmatpush1.bf16.msra.mxu0 %v381
    %517 = vmatprep.subr.bf16.mxu0 0
    %518 = vmatpush1.bf16.msra.mxu0 %v382
    %519 = vmatprep.subr.bf16.mxu0 0
    %520 = vmatpush1.bf16.msra.mxu0 %v383
    %521 = vmatprep.subr.bf16.mxu0 0
    %522 = vmatpush1.bf16.msra.mxu0 %v384
    %523 = vmatprep.subr.bf16.mxu0 0
    %524 = vmatpush1.bf16.msra.mxu0 %v385
    %525 = vmatprep.subr.bf16.mxu0 0
    %526 = vmatpush1.bf16.msra.mxu0 %v386
    %527 = vmatprep.subr.bf16.mxu0 0
    %528 = vmatpush1.bf16.msra.mxu0 %v387
    %529 = vmatprep.subr.bf16.mxu0 0
    %530 = vmatpush1.bf16.msra.mxu0 %v388
    %531 = vmatprep.mubr.bf16.mxu0 %v52
    %532 = vmatmul.mubr.bf16.gmra.mrb[0].mxu0 %v51
    %v533 = vpop.f32.mrb[0].mxu0
    %v534 = vadd.f32 %v494, %v533
    %v535 = vpop.f32.mrb[0].mxu0
    %v536 = vpop.f32.mrb[0].mxu0
    %v537 = vpop.f32.mrb[0].mxu0
    %538 = vdwg.mxu0
    %539 = vmatprep.subr.bf16.mxu0 0
    %540 = vmatpush1.bf16.msra.mxu0 %v389
    %541 = vmatprep.subr.bf16.mxu0 0
    %542 = vmatpush1.bf16.msra.mxu0 %v390
    %543 = vmatprep.subr.bf16.mxu0 0
    %544 = vmatpush1.bf16.msra.mxu0 %v391
    %545 = vmatprep.subr.bf16.mxu0 0
    %546 = vmatpush1.bf16.msra.mxu0 %v392
    %547 = vmatprep.subr.bf16.mxu0 0
    %548 = vmatpush1.bf16.msra.mxu0 %v393
    %549 = vmatprep.subr.bf16.mxu0 0
    %550 = vmatpush1.bf16.msra.mxu0 %v394
    %551 = vmatprep.subr.bf16.mxu0 0
    %552 = vmatpush1.bf16.msra.mxu0 %v395
    %553 = vmatprep.subr.bf16.mxu0 0
    %554 = vmatpush1.bf16.msra.mxu0 %v396
    %555 = vmatprep.subr.bf16.mxu0 0
    %556 = vmatpush1.bf16.msra.mxu0 %v397
    %557 = vmatprep.subr.bf16.mxu0 0
    %558 = vmatpush1.bf16.msra.mxu0 %v398
    %559 = vmatprep.subr.bf16.mxu0 0
    %560 = vmatpush1.bf16.msra.mxu0 %v399
    %561 = vmatprep.subr.bf16.mxu0 0
    %562 = vmatpush1.bf16.msra.mxu0 %v400
    %563 = vmatprep.subr.bf16.mxu0 0
    %564 = vmatpush1.bf16.msra.mxu0 %v401
    %565 = vmatprep.subr.bf16.mxu0 0
    %566 = vmatpush1.bf16.msra.mxu0 %v402
    %567 = vmatprep.subr.bf16.mxu0 0
    %568 = vmatpush1.bf16.msra.mxu0 %v403
    %569 = vmatprep.subr.bf16.mxu0 0
    %570 = vmatpush1.bf16.msra.mxu0 %v404
    %571 = vmatprep.mubr.bf16.mxu0 %v54
    %572 = vmatmul.mubr.bf16.gmra.mrb[0].mxu0 %v53
    %v573 = vpop.f32.mrb[0].mxu0
    %v574 = vadd.f32 %v534, %v573
    %v575 = vpop.f32.mrb[0].mxu0
    %v576 = vpop.f32.mrb[0].mxu0
    %v577 = vpop.f32.mrb[0].mxu0
    %578 = vdwg.mxu0
    %579 = vmatprep.subr.bf16.mxu0 0
    %580 = vmatpush1.bf16.msra.mxu0 %v405
    %581 = vmatprep.subr.bf16.mxu0 0
    %582 = vmatpush1.bf16.msra.mxu0 0
    %583 = vmatprep.subr.bf16.mxu0 0
    %584 = vmatpush1.bf16.msra.mxu0 0
    %585 = vmatprep.subr.bf16.mxu0 0
    %586 = vmatpush1.bf16.msra.mxu0 0
    %587 = vmatprep.subr.bf16.mxu0 0
    %588 = vmatpush1.bf16.msra.mxu0 0
    %589 = vmatprep.subr.bf16.mxu0 0
    %590 = vmatpush1.bf16.msra.mxu0 0
    %591 = vmatprep.subr.bf16.mxu0 0
    %592 = vmatpush1.bf16.msra.mxu0 0
    %593 = vmatprep.subr.bf16.mxu0 0
    %594 = vmatpush1.bf16.msra.mxu0 0
    %595 = vmatprep.subr.bf16.mxu0 0
    %596 = vmatpush1.bf16.msra.mxu0 0
    %597 = vmatprep.subr.bf16.mxu0 0
    %598 = vmatpush1.bf16.msra.mxu0 0
    %599 = vmatprep.subr.bf16.mxu0 0
    %600 = vmatpush1.bf16.msra.mxu0 0
    %601 = vmatprep.subr.bf16.mxu0 0
    %602 = vmatpush1.bf16.msra.mxu0 0
    %603 = vmatprep.subr.bf16.mxu0 0
    %604 = vmatpush1.bf16.msra.mxu0 0
    %605 = vmatprep.subr.bf16.mxu0 0
    %606 = vmatpush1.bf16.msra.mxu0 0
    %607 = vmatprep.subr.bf16.mxu0 0
    %608 = vmatpush1.bf16.msra.mxu0 0
    %609 = vmatprep.subr.bf16.mxu0 0
    %610 = vmatpush1.bf16.msra.mxu0 0
    %611 = vmatprep.mubr.bf16.mxu0 0
    %612 = vmatmul.mubr.bf16.gmra.mrb[0].mxu0 %v457
    %v613 = vpop.f32.mrb[0].mxu0
    %v614 = vadd.f32 %v574, %v613
    %v615 = vpop.f32.mrb[0].mxu0
    %v616 = vpop.f32.mrb[0].mxu0
    %v617 = vpop.f32.mrb[0].mxu0
    %618 = vdwg.mxu0
    %v619 = vmax.f32 %v614, 0.0
    %v620 = vpack.c.bf16 %v619, %v619
    %v621 = vld [vmem:[%s3] sm:$0xf]
    %v622 = vld [vmem:[%s3 + $0x4] sm:$0xf]
    %v623 = vld [vmem:[%s3 + $0x8] sm:$0xf]
    %v624 = vld [vmem:[%s3 + $0xc] sm:$0xf]
    %v625 = vld [vmem:[%s3 + $0x10] sm:$0xf]
    %v626 = vld [vmem:[%s3 + $0x14] sm:$0xf]
    %v627 = vld [vmem:[%s3 + $0x18] sm:$0xf]
    %v628 = vld [vmem:[%s3 + $0x1c] sm:$0xf]
    %v629 = vld [vmem:[%s3 + $0x20] sm:$0xf]
    %v630 = vld [vmem:[%s3 + $0x24] sm:$0xf]
    %v631 = vld [vmem:[%s3 + $0x28] sm:$0xf]
    %v632 = vld [vmem:[%s3 + $0x2c] sm:$0xf]
    %v633 = vld [vmem:[%s3 + $0x30] sm:$0xf]
    %v634 = vld [vmem:[%s3 + $0x34] sm:$0xf]
    %v635 = vld [vmem:[%s3 + $0x38] sm:$0xf]
    %v636 = vld [vmem:[%s3 + $0x3c] sm:$0xf]
    %v637 = vld [vmem:[%s4] sm:$0x1]
    %v639 = vlaneseq
    %v640 = vshrl.u32 %v639, 7
    %v641 = vsub.s32 0, %v640
    %v642 = vrot.slane %v637, %v641
    %v660 = vunpack.c.l.b16 %v621
    %v661 = vunpack.c.l.b16 %v622
    %v662 = vunpack.c.l.b16 %v623
    %v663 = vunpack.c.l.b16 %v624
    %v664 = vunpack.c.l.b16 %v625
    %v665 = vunpack.c.l.b16 %v626
    %v666 = vunpack.c.l.b16 %v627
    %v667 = vunpack.c.l.b16 %v628
    %v668 = vunpack.c.l.b16 %v629
    %v669 = vunpack.c.l.b16 %v630
    %v670 = vunpack.c.l.b16 %v631
    %v671 = vunpack.c.l.b16 %v632
    %v672 = vunpack.c.l.b16 %v633
    %v673 = vunpack.c.l.b16 %v634
    %v674 = vunpack.c.l.b16 %v635
    %v675 = vunpack.c.l.b16 %v636
    %v676 = vpack.c.b16 %v661, %v660
    %v677 = vpack.c.b16 %v663, %v662
    %v678 = vpack.c.b16 %v665, %v664
    %v679 = vpack.c.b16 %v667, %v666
    %v680 = vpack.c.b16 %v669, %v668
    %v681 = vpack.c.b16 %v671, %v670
    %v682 = vpack.c.b16 %v673, %v672
    %v683 = vpack.c.b16 %v675, %v674
    %692 = vmatprep.subr.bf16.mxu0 0
    %693 = vmatpush1.bf16.msra.mxu0 %v676
    %694 = vmatprep.subr.bf16.mxu0 0
    %695 = vmatpush1.bf16.msra.mxu0 %v677
    %696 = vmatprep.subr.bf16.mxu0 0
    %697 = vmatpush1.bf16.msra.mxu0 %v678
    %698 = vmatprep.subr.bf16.mxu0 0
    %699 = vmatpush1.bf16.msra.mxu0 %v679
    %700 = vmatprep.subr.bf16.mxu0 0
    %701 = vmatpush1.bf16.msra.mxu0 %v680
    %702 = vmatprep.subr.bf16.mxu0 0
    %703 = vmatpush1.bf16.msra.mxu0 %v681
    %704 = vmatprep.subr.bf16.mxu0 0
    %705 = vmatpush1.bf16.msra.mxu0 %v682
    %706 = vmatprep.subr.bf16.mxu0 0
    %707 = vmatpush1.bf16.msra.mxu0 %v683
    %708 = vmatprep.subr.bf16.mxu0 0
    %709 = vmatpush1.bf16.msra.mxu0 0
    %710 = vmatprep.subr.bf16.mxu0 0
    %711 = vmatpush1.bf16.msra.mxu0 0
    %712 = vmatprep.subr.bf16.mxu0 0
    %713 = vmatpush1.bf16.msra.mxu0 0
    %714 = vmatprep.subr.bf16.mxu0 0
    %715 = vmatpush1.bf16.msra.mxu0 0
    %716 = vmatprep.subr.bf16.mxu0 0
    %717 = vmatpush1.bf16.msra.mxu0 0
    %718 = vmatprep.subr.bf16.mxu0 0
    %719 = vmatpush1.bf16.msra.mxu0 0
    %720 = vmatprep.subr.bf16.mxu0 0
    %721 = vmatpush1.bf16.msra.mxu0 0
    %722 = vmatprep.subr.bf16.mxu0 0
    %723 = vmatpush1.bf16.msra.mxu0 0
    %724 = vmatprep.mubr.bf16.mxu0 0
    %725 = vmatmul.mubr.bf16.gmra.mrb[0].mxu0 %v620
    %v726 = vpop.f32.mrb[0].mxu0
    %v727 = vadd.f32 %v642, %v726
    %v728 = vpop.f32.mrb[0].mxu0
    %v729 = vpop.f32.mrb[0].mxu0
    %v730 = vpop.f32.mrb[0].mxu0
    %731 = vdwg.mxu0
    %v732 = vmax.f32 %v727, 0.0
    %v733 = vpack.c.bf16 %v732, %v732
    %v734 = vld [vmem:[%s5] sm:$0xf]
    %v735 = vld [vmem:[%s5 + $0x4] sm:$0xf]
    %v736 = vld [vmem:[%s5 + $0x8] sm:$0xf]
    %v737 = vld [vmem:[%s5 + $0xc] sm:$0xf]
    %v738 = vld [vmem:[%s5 + $0x10] sm:$0xf]
    %v739 = vld [vmem:[%s5 + $0x14] sm:$0xf]
    %v740 = vld [vmem:[%s5 + $0x18] sm:$0xf]
    %v741 = vld [vmem:[%s5 + $0x1c] sm:$0xf]
    %v742 = vld [vmem:[%s6] sm:$0x1]
    %v744 = vlaneseq
    %v745 = vshrl.u32 %v744, 7
    %v746 = vsub.s32 0, %v745
    %v747 = vrot.slane %v742, %v746
    %v757 = vunpack.c.l.b16 %v734
    %v758 = vunpack.c.l.b16 %v735
    %v759 = vunpack.c.l.b16 %v736
    %v760 = vunpack.c.l.b16 %v737
    %v761 = vunpack.c.l.b16 %v738
    %v762 = vunpack.c.l.b16 %v739
    %v763 = vunpack.c.l.b16 %v740
    %v764 = vunpack.c.l.b16 %v741
    %v765 = vpack.c.b16 %v758, %v757
    %v766 = vpack.c.b16 %v760, %v759
    %v767 = vpack.c.b16 %v762, %v761
    %v768 = vpack.c.b16 %v764, %v763
    %vm773 = vcmask 523264
    %v775 = vsel %vm773, %v733, 0
    %777 = vmatprep.subr.bf16.mxu0 0
    %778 = vmatpush1.bf16.msra.mxu0 %v765
    %779 = vmatprep.subr.bf16.mxu0 0
    %780 = vmatpush1.bf16.msra.mxu0 %v766
    %781 = vmatprep.subr.bf16.mxu0 0
    %782 = vmatpush1.bf16.msra.mxu0 %v767
    %783 = vmatprep.subr.bf16.mxu0 0
    %784 = vmatpush1.bf16.msra.mxu0 %v768
    %785 = vmatprep.subr.bf16.mxu0 0
    %786 = vmatpush1.bf16.msra.mxu0 0
    %787 = vmatprep.subr.bf16.mxu0 0
    %788 = vmatpush1.bf16.msra.mxu0 0
    %789 = vmatprep.subr.bf16.mxu0 0
    %790 = vmatpush1.bf16.msra.mxu0 0
    %791 = vmatprep.subr.bf16.mxu0 0
    %792 = vmatpush1.bf16.msra.mxu0 0
    %793 = vmatprep.subr.bf16.mxu0 0
    %794 = vmatpush1.bf16.msra.mxu0 0
    %795 = vmatprep.subr.bf16.mxu0 0
    %796 = vmatpush1.bf16.msra.mxu0 0
    %797 = vmatprep.subr.bf16.mxu0 0
    %798 = vmatpush1.bf16.msra.mxu0 0
    %799 = vmatprep.subr.bf16.mxu0 0
    %800 = vmatpush1.bf16.msra.mxu0 0
    %801 = vmatprep.subr.bf16.mxu0 0
    %802 = vmatpush1.bf16.msra.mxu0 0
    %803 = vmatprep.subr.bf16.mxu0 0
    %804 = vmatpush1.bf16.msra.mxu0 0
    %805 = vmatprep.subr.bf16.mxu0 0
    %806 = vmatpush1.bf16.msra.mxu0 0
    %807 = vmatprep.subr.bf16.mxu0 0
    %808 = vmatpush1.bf16.msra.mxu0 0
    %809 = vmatprep.mubr.bf16.mxu0 0
    %810 = vmatmul.mubr.bf16.gmra.mrb[0].mxu0 %v775
    %v811 = vpop.f32.mrb[0].mxu0
    %v812 = vadd.f32 %v747, %v811
    %v813 = vpop.f32.mrb[0].mxu0
    %v814 = vpop.f32.mrb[0].mxu0
    %v815 = vpop.f32.mrb[0].mxu0
    %816 = vdwg.mxu0
    %vm817 = vcmask 80896
    %v818 = vsel %vm817, %v812, -inf
    %819 = vmax.xlane.f32.xlu0 %v818
    %v820 = vpop.xlane.xlu0 %819
    %v821 = vsub.f32 %v812, %v820
    %v822 = vmul.f32 %v821, 1.442695
    %v823 = vpow.pop %v822
    %v824 = vsel %vm817, %v823, 0.0
    %825 = vadd.xlane.f32.xlu0 %v824
    %v826 = vpop.xlane.xlu0 %825
    %v827 = vlog2.pop %v826
    %v828 = vmul.f32 %v827, 0.6931472
    %v829 = vsub.f32 %v821, %v828
    %830 = vst.msk [vmem:[#allocation5] sm:$0xff] %vm817, %v829
    // Predicated region
    $region34: #{tpu_custom_call.1} parent=1 // pred_check
      _
    $region35: #{tpu_custom_call.1} parent=1 // pred_check_branch
      %832 = sbr.rel (0) target = $region37
    $region36: #{tpu_custom_call.1} parent=1 // pred_region
      %s834 = ssub.s32 128, 128
      %835 = vsyncadd [#allocation4], %s834
      %s837 = sshll.u32 [#allocation5], 4
      %s838 = int_to_ptr.vmem [resolvable:$true] %s837
      %840 = dma.vmem_to_hbm [thread:$0]  %s838, 128, %s7, [#allocation4]
    $region37: #{tpu_custom_call.1} parent=1 // pred_fallthru
      _
    // Predicated region
    $region38: #{tpu_custom_call.1} parent=1 // pred_check
      _
    $region39: #{tpu_custom_call.1} parent=1 // pred_check_branch
      %842 = sbr.rel (0) target = $region41
    $region40: #{tpu_custom_call.1} parent=1 // pred_region
      %843 = dma.done [#allocation4], 128
    $region41: #{tpu_custom_call.1} parent=1 // pred_fallthru
      _
    %844 = vsyncpa [#allocation3], 1
    %845 = vsyncpa [#allocation4], 1

</llo_original>
